<compile_context>
chip_gen: v7x
topology: tpu7x:2x2x1
jax: 0.10.0
libtpu: 0.0.40
codegen_flags: <defaults>
</compile_context>

<pallas_src>
import jax
import jax.numpy as jnp
from jax.experimental import pallas as pl
from jax.experimental.pallas import tpu as pltpu


def _gauss_kernel(x_ref, w_ref, b_ref, o_ref):
    k = pl.program_id(2)
    nk = pl.num_programs(2)

    # Seed the resident f32 output tile with the broadcast bias at k == 0.
    @pl.when(k == 0)
    def _seed():
        o_ref[...] = jnp.broadcast_to(b_ref[...], o_ref.shape)

    # (tm, tk) @ (tk, tn) on the MXU, f32 accumulation.
    acc = o_ref[...] + jnp.dot(
        x_ref[...], w_ref[...], preferred_element_type=jnp.float32)

    # Exactly one full-tile store per k-step; ReLU fused into the last store.
    @pl.when(k < nk - 1)
    def _store():
        o_ref[...] = acc

    @pl.when(k == nk - 1)
    def _store_relu():
        o_ref[...] = jnp.maximum(acc, 0.0)


def _round_up(x, m):
    return ((x + m - 1) // m) * m


def _vmem_capacity_bytes():
    try:
        return int(pltpu.get_tpu_info().vmem_capacity_bytes)
    except Exception:
        return 128 << 20  # conservative default (v5e/v6e class)


def gauss_layer(x, weight, bias, *, tm=None, tn=None, tk=None,
                use_bf16=True, w_buffers=None):
    """relu(x @ weight.T + bias) via Pallas. x:(M,K) weight:(N,K) bias:(N,)."""
    M, K = x.shape
    N, Kw = weight.shape
    assert K == Kw and bias.shape == (N,)

    in_dtype = jnp.bfloat16 if use_bf16 else jnp.float32
    in_bytes = 2 if use_bf16 else 4

    vmem_cap = _vmem_capacity_bytes()
    two_core = vmem_cap <= (64 << 20)   # v7x-class: 64 MiB/TC, 2 TCs/chip

    lane_align = 256                    # v6e/v7x MXU native pass (128-multiple, ok on v5e)
    sub_align = 16                      # bf16 sublane packing (>= 8 needed for f32)

    # Per-generation tile caps (VMEM budget).
    if two_core:
        cap_m, cap_n, cap_k = 512, 1024, 512
    else:
        cap_m, cap_n, cap_k = 1024, 2048, 512

    # Single-weight-pass lever: tm = padded M when it fits, so each W tile is
    # fetched from HBM exactly once; spend the rest of VMEM on tn / tk.
    d_tm = min(_round_up(M, sub_align), cap_m)
    d_tn = min(_round_up(N, lane_align), cap_n)
    d_tk = min(_round_up(K, lane_align), cap_k)

    tn_given = tn is not None
    tm = tm or d_tm
    tn = tn or d_tn
    tk = tk or d_tk

    M_pad = _round_up(M, tm)
    N_pad = _round_up(N, tn)
    K_pad = _round_up(K, tk)

    # v7x: keep >= 2 blocks over the parallel (i, j) axes so both TCs get work.
    if two_core and not tn_given:
        if (M_pad // tm) * (N_pad // tn) < 2 and tn % (2 * lane_align) == 0:
            tn //= 2
            N_pad = _round_up(N, tn)

    # Pad operands to the tile grid (zero padding is exact for matmul + bias;
    # padded rows/cols are sliced off the output).
    xp = x.astype(in_dtype)
    if (M_pad, K_pad) != (M, K):
        xp = jnp.pad(xp, ((0, M_pad - M), (0, K_pad - K)))

    # Weight consumed as (K, N): one cast+transpose per call, amortized/fused
    # under jit, keeps the in-kernel contraction NN (no per-tile XLU work).
    wp = weight.astype(in_dtype).T
    if (K_pad, N_pad) != (K, N):
        wp = jnp.pad(wp, ((0, K_pad - K), (0, N_pad - N)))

    bp = bias.astype(jnp.float32).reshape(1, N)
    if N_pad != N:
        bp = jnp.pad(bp, ((0, 0), (0, N_pad - N)))

    grid = (M_pad // tm, N_pad // tn, K_pad // tk)

    # VMEM limit from the actual double-buffered footprint (+25% headroom).
    footprint = (2 * (tm * tk * in_bytes + tk * tn * in_bytes + tn * 4)
                 + 2 * tm * tn * 4)
    vmem_limit = int(footprint * 1.25) + (4 << 20)
    vmem_limit = max(vmem_limit, 32 << 20)
    vmem_limit = min(vmem_limit, int(vmem_cap * 3 // 4))

    w_spec_kwargs = {}
    if w_buffers is not None and w_buffers > 2:
        # Deeper buffering of the streamed weight for the DMA-exposed case.
        w_spec_kwargs["pipeline_mode"] = pl.Buffered(w_buffers)

    out_pad = pl.pallas_call(
        _gauss_kernel,
        out_shape=jax.ShapeDtypeStruct((M_pad, N_pad), jnp.float32),
        grid_spec=pltpu.PrefetchScalarGridSpec(
            num_scalar_prefetch=0,
            grid=grid,
            in_specs=[
                pl.BlockSpec((tm, tk), lambda i, j, k: (i, k)),                 # x tile
                pl.BlockSpec((tk, tn), lambda i, j, k: (k, j), **w_spec_kwargs),  # W (K,N) tile
                pl.BlockSpec((1, tn), lambda i, j, k: (0, j)),                  # bias tile
            ],
            out_specs=pl.BlockSpec((tm, tn), lambda i, j, k: (i, j)),
        ),
        compiler_params=pltpu.CompilerParams(
            dimension_semantics=("parallel", "parallel", "arbitrary"),
            vmem_limit_bytes=vmem_limit,
        ),
    )(xp, wp, bp)

    if (M_pad, N_pad) != (M, N):
        out_pad = out_pad[:M, :N]
    return out_pad


if __name__ == "__main__":
    # Small shapes consistent with the module: batch=8, in_features=32, out=32.
    batch, in_features, out_features = 8, 32, 32

    key = jax.random.PRNGKey(0)
    kx, kw, kb = jax.random.split(key, 3)

    x = jax.random.normal(kx, (batch, in_features), dtype=jnp.float32)
    bound = 1.0 / (in_features ** 0.5)
    weight = jax.random.uniform(
        kw, (out_features, in_features), minval=-bound, maxval=bound,
        dtype=jnp.float32)
    bias = jax.random.uniform(
        kb, (out_features,), minval=-bound, maxval=bound, dtype=jnp.float32)

    ref = jnp.maximum(x @ weight.T + bias, 0.0)

    # bf16 MXU path (default).
    out = jax.block_until_ready(gauss_layer(x, weight, bias))
    assert out.shape == ref.shape
    assert jnp.allclose(out, ref, atol=2e-2, rtol=2e-2), "mismatch (bf16 path)"

    # f32 path sanity check (tight tolerance, verifies kernel structure).
    out_f32 = jax.block_until_ready(gauss_layer(x, weight, bias, use_bf16=False))
    assert jnp.allclose(out_f32, ref, atol=1e-5, rtol=1e-5), "mismatch (f32 path)"

    # Multi-block / multi-k accumulation path (forced 128 tiles -> grid (2,2,3)).
    M2, K2, N2 = 256, 384, 256
    k2x, k2w, k2b = jax.random.split(jax.random.PRNGKey(1), 3)
    x2 = jax.random.normal(k2x, (M2, K2), dtype=jnp.float32)
    b2nd = 1.0 / (K2 ** 0.5)
    w2 = jax.random.uniform(k2w, (N2, K2), minval=-b2nd, maxval=b2nd,
                            dtype=jnp.float32)
    bb2 = jax.random.uniform(k2b, (N2,), minval=-b2nd, maxval=b2nd,
                             dtype=jnp.float32)
    out2 = jax.block_until_ready(
        gauss_layer(x2, w2, bb2, tm=128, tn=128, tk=128))
    ref2 = jnp.maximum(x2 @ w2.T + bb2, 0.0)
    assert jnp.allclose(out2, ref2, atol=2e-2, rtol=2e-2), "mismatch (tiled)"

    print("KERNEL_OK")
</pallas_src>

<mosaic_0001>
module attributes {stable_mosaic.version = 11 : i64} {
  func.func @_gauss_kernel(%arg0: i32, %arg1: i32, %arg2: i32, %arg3: memref<16x256xbf16, #tpu.memory_space<vmem>>, %arg4: memref<256x256xbf16, #tpu.memory_space<vmem>>, %arg5: memref<1x256xf32, #tpu.memory_space<vmem>>, %arg6: memref<16x256xf32, #tpu.memory_space<vmem>>) attributes {dimension_semantics = [#tpu.dimension_semantics<parallel>, #tpu.dimension_semantics<parallel>, #tpu.dimension_semantics<arbitrary>], iteration_bounds = array<i64: 1, 1, 1>, scalar_prefetch = 0 : i64, scratch_operands = 0 : i64, tpu.core_type = #tpu.core_type<tc>, window_params = [{transform_indices = @transform_0, window_bounds = array<i64: 16, 256>}, {transform_indices = @transform_1, window_bounds = array<i64: 256, 256>}, {transform_indices = @transform_2, window_bounds = array<i64: 1, 256>}, {transform_indices = @transform_3, window_bounds = array<i64: 16, 256>}]} {
    %c0_i32 = arith.constant 0 : i32
    %0 = arith.cmpi eq, %arg2, %c0_i32 : i32
    %1 = arith.extui %0 : i1 to i32
    %c0_i32_0 = arith.constant 0 : i32
    %2 = arith.cmpi ne, %1, %c0_i32_0 : i32
    scf.if %2 {
      %c0_10 = arith.constant 0 : index
      %c0_11 = arith.constant 0 : index
      %14 = vector.load %arg5[%c0_10, %c0_11] : memref<1x256xf32, #tpu.memory_space<vmem>>, vector<1x256xf32>
      %15 = vector.shape_cast %14 : vector<1x256xf32> to vector<1x256xf32>
      %16 = vector.broadcast %15 : vector<1x256xf32> to vector<16x256xf32>
      %c0_12 = arith.constant 0 : index
      %c0_13 = arith.constant 0 : index
      %17 = vector.load %arg6[%c0_12, %c0_13] : memref<16x256xf32, #tpu.memory_space<vmem>>, vector<16x256xf32>
      tpu.vector_store %arg6[%c0_12, %c0_13], %16 {strides = array<i32>} : memref<16x256xf32, #tpu.memory_space<vmem>>, vector<16x256xf32>,
    } else {
    }
    %c0 = arith.constant 0 : index
    %c0_1 = arith.constant 0 : index
    %3 = vector.load %arg6[%c0, %c0_1] : memref<16x256xf32, #tpu.memory_space<vmem>>, vector<16x256xf32>
    %c0_2 = arith.constant 0 : index
    %c0_3 = arith.constant 0 : index
    %4 = vector.load %arg3[%c0_2, %c0_3] : memref<16x256xbf16, #tpu.memory_space<vmem>>, vector<16x256xbf16>
    %c0_4 = arith.constant 0 : index
    %c0_5 = arith.constant 0 : index
    %5 = vector.load %arg4[%c0_4, %c0_5] : memref<256x256xbf16, #tpu.memory_space<vmem>>, vector<256x256xbf16>
    %cst = arith.constant dense<0.000000e+00> : vector<16x256xf32>
    %6 = tpu.matmul %4, %5, %cst {dimension_numbers = #tpu.dot_dimension_numbers<[1], [0], [0], [1], [0, 0, 1, 1], [], []>} : vector<16x256xbf16>, vector<256x256xbf16>, vector<16x256xf32> -> vector<16x256xf32>
    %7 = arith.addf %3, %6 : vector<16x256xf32>
    %c0_i32_6 = arith.constant 0 : i32
    %8 = arith.cmpi slt, %arg2, %c0_i32_6 : i32
    %9 = arith.extui %8 : i1 to i32
    %c0_i32_7 = arith.constant 0 : i32
    %10 = arith.cmpi ne, %9, %c0_i32_7 : i32
    scf.if %10 {
      %c0_10 = arith.constant 0 : index
      %c0_11 = arith.constant 0 : index
      %14 = vector.load %arg6[%c0_10, %c0_11] : memref<16x256xf32, #tpu.memory_space<vmem>>, vector<16x256xf32>
      tpu.vector_store %arg6[%c0_10, %c0_11], %7 {strides = array<i32>} : memref<16x256xf32, #tpu.memory_space<vmem>>, vector<16x256xf32>,
    } else {
    }
    %c0_i32_8 = arith.constant 0 : i32
    %11 = arith.cmpi eq, %arg2, %c0_i32_8 : i32
    %12 = arith.extui %11 : i1 to i32
    %c0_i32_9 = arith.constant 0 : i32
    %13 = arith.cmpi ne, %12, %c0_i32_9 : i32
    scf.if %13 {
      %cst_10 = arith.constant 0.000000e+00 : f32
      %14 = vector.broadcast %cst_10 : f32 to vector<16x256xf32>
      %15 = arith.maximumf %7, %14 : vector<16x256xf32>
      %c0_11 = arith.constant 0 : index
      %c0_12 = arith.constant 0 : index
      %16 = vector.load %arg6[%c0_11, %c0_12] : memref<16x256xf32, #tpu.memory_space<vmem>>, vector<16x256xf32>
      tpu.vector_store %arg6[%c0_11, %c0_12], %15 {strides = array<i32>} : memref<16x256xf32, #tpu.memory_space<vmem>>, vector<16x256xf32>,
    } else {
    }
    return
  }
  func.func @transform_0(%arg0: i32, %arg1: i32, %arg2: i32) -> (i32, i32) {
    %c0_i32 = arith.constant 0 : i32
    return %arg0, %arg2 : i32, i32
  }
  func.func @transform_1(%arg0: i32, %arg1: i32, %arg2: i32) -> (i32, i32) {
    %c0_i32 = arith.constant 0 : i32
    return %arg2, %arg1 : i32, i32
  }
  func.func @transform_2(%arg0: i32, %arg1: i32, %arg2: i32) -> (i32, i32) {
    %c0_i32 = arith.constant 0 : i32
    %c0_i32_0 = arith.constant 0 : i32
    return %c0_i32, %arg1 : i32, i32
  }
  func.func @transform_3(%arg0: i32, %arg1: i32, %arg2: i32) -> (i32, i32) {
    %c0_i32 = arith.constant 0 : i32
    return %arg0, %arg1 : i32, i32
  }
}

</mosaic_0001>

<llo_original>
// kernel: tpu_custom_call.1
$region0: #{tpu_custom_call.1}
  #allocation0 [shape = 'u32[]', space=smem, size = 0x4, offset = 0x4, fixed_abs, tag = 'smem constant byte address 0x4 - core index']
  #allocation1 [shape = 'u32[144,128]{1,0:T(1,128)}', space=vmem, size = 0x12000, scoped, tag = 'internal scratch']
  %s0 = inlined_call_operand.hbm [shape: bf16[16,256], index: 0, kind: input, shape index: {}]
  %s1 = inlined_call_operand.hbm [shape: bf16[256,256], index: 1, kind: input, shape index: {}]
  %s2 = inlined_call_operand.vmem [shape: f32[1,256], index: 2, kind: input, shape index: {}]
  %s3 = inlined_call_operand.hbm [shape: f32[16,256], index: 3, kind: output, shape index: {}]
  %s4 = sld [smem:[#allocation0]]
  $region42: #{tpu_custom_call.1} parent=0
    _
  %s6 = ssub.s32 1, %s4
  %s7 = scalar_select 0, %s6, %s4
  $region1: #{tpu_custom_call.1} parent=0
    #allocation2 [shape = 'u8[8192]{0}', space=vmem, size = 0x2000, scoped, tag = 'input window, operand 0, single buffered']
    #allocation3 [shape = 's32[1]{0}', space=sflag, size = 0x4, scoped, tag = 'scoped memory for tpu_custom_call.1']
    #allocation4 [shape = 's32[1]{0}', space=sflag, size = 0x4, scoped, tag = 'scoped memory for tpu_custom_call.1']
    #allocation5 [shape = 'u8[131072]{0}', space=vmem, size = 0x20000, scoped, tag = 'input window, operand 1, single buffered']
    #allocation6 [shape = 's32[1]{0}', space=sflag, size = 0x4, scoped, tag = 'scoped memory for tpu_custom_call.1']
    #allocation7 [shape = 'u8[16384]{0}', space=vmem, size = 0x4000, scoped, tag = 'output window, operand 0, single buffered']
    %8 = vsyncpa [#allocation3], 0
    %9 = vsyncpa [#allocation6], 0
    %10 = vsyncpa [#allocation4], 0
    // Predicated region
    $region2: #{tpu_custom_call.1} parent=1 // pred_check
      _
    $region3: #{tpu_custom_call.1} parent=1 // pred_check_branch
      %12 = sbr.rel (0) target = $region5
    $region4: #{tpu_custom_call.1} parent=1 // pred_region
      %s14 = ssub.s32 256, 256
      %15 = vsyncadd [#allocation3], %s14
      %s16 = sshll.u32 [#allocation2], 4
      %s17 = int_to_ptr.vmem [resolvable:$true] %s16
      %22 = dma.hbm_to_vmem [thread:$0]  %s0, 256, %s17, [#allocation3], 128, 128, 8
    $region5: #{tpu_custom_call.1} parent=1 // pred_fallthru
      _
    // Predicated region
    $region6: #{tpu_custom_call.1} parent=1 // pred_check
      _
    $region7: #{tpu_custom_call.1} parent=1 // pred_check_branch
      %24 = sbr.rel (0) target = $region9
    $region8: #{tpu_custom_call.1} parent=1 // pred_region
      %s26 = ssub.s32 4096, 4096
      %27 = vsyncadd [#allocation6], %s26
      %s28 = sshll.u32 [#allocation5], 4
      %s29 = int_to_ptr.vmem [resolvable:$true] %s28
      %34 = dma.hbm_to_vmem [thread:$0]  %s1, 4096, %s29, [#allocation6], 128, 128, 8
    $region9: #{tpu_custom_call.1} parent=1 // pred_fallthru
      _
    // Predicated region
    $region10: #{tpu_custom_call.1} parent=1 // pred_check
      _
    $region11: #{tpu_custom_call.1} parent=1 // pred_check_branch
      %36 = sbr.rel (0) target = $region13
    $region12: #{tpu_custom_call.1} parent=1 // pred_region
      _
    $region13: #{tpu_custom_call.1} parent=1 // pred_fallthru
      _
    // Predicated region
    $region14: #{tpu_custom_call.1} parent=1 // pred_check
      _
    $region15: #{tpu_custom_call.1} parent=1 // pred_check_branch
      %38 = sbr.rel (0) target = $region17
    $region16: #{tpu_custom_call.1} parent=1 // pred_region
      %39 = dma.done [#allocation3], 256
    $region17: #{tpu_custom_call.1} parent=1 // pred_fallthru
      _
    // Predicated region
    $region18: #{tpu_custom_call.1} parent=1 // pred_check
      _
    $region19: #{tpu_custom_call.1} parent=1 // pred_check_branch
      %41 = sbr.rel (0) target = $region21
    $region20: #{tpu_custom_call.1} parent=1 // pred_region
      %42 = dma.done [#allocation6], 4096
    $region21: #{tpu_custom_call.1} parent=1 // pred_fallthru
      _
    %p43 = scmp.eq.s32.totalorder 0, 0
    // Predicated region
    $region22: #{tpu_custom_call.1} parent=1 // pred_check
      %p44 = pneg %p43
    $region23: #{tpu_custom_call.1} parent=1 // pred_check_branch
      %46 = sbr.rel (%p44) target = $region25
    $region24: #{tpu_custom_call.1} parent=1 // pred_region
      %v47 = vld [vmem:[%s2] sm:$0x3]
      %v49 = vlaneseq
      %v50 = vshrl.u32 %v49, 7
      %v51 = vsub.s32 0, %v50
      %v52 = vrot.slane %v47, %v51
      %v53 = vlaneseq
      %v54 = vshrl.u32 %v53, 7
      %v55 = vsub.s32 1, %v54
      %v56 = vrot.slane %v47, %v55
      %59 = vst [vmem:[#allocation7] sm:$0xff] %v52
      %60 = vst [vmem:[#allocation7 + $0x8] sm:$0xff] %v56
      %61 = vst [vmem:[#allocation7 + $0x10] sm:$0xff] %v52
      %62 = vst [vmem:[#allocation7 + $0x18] sm:$0xff] %v56
    $region25: #{tpu_custom_call.1} parent=1 // pred_fallthru
      _
    %v63 = vld [vmem:[#allocation7] sm:$0xff]
    %v64 = vld [vmem:[#allocation7 + $0x8] sm:$0xff]
    %v65 = vld [vmem:[#allocation7 + $0x10] sm:$0xff]
    %v66 = vld [vmem:[#allocation7 + $0x18] sm:$0xff]
    %v67 = vld [vmem:[#allocation2] sm:$0xff]
    %v68 = vld [vmem:[#allocation2 + $0x8] sm:$0xff]
    %v69 = vld [vmem:[#allocation5] sm:$0xff]
    %v70 = vld [vmem:[#allocation5 + $0x8] sm:$0xff]
    %v71 = vld [vmem:[#allocation5 + $0x10] sm:$0xff]
    %v72 = vld [vmem:[#allocation5 + $0x18] sm:$0xff]
    %v73 = vld [vmem:[#allocation5 + $0x20] sm:$0xff]
    %v74 = vld [vmem:[#allocation5 + $0x28] sm:$0xff]
    %v75 = vld [vmem:[#allocation5 + $0x30] sm:$0xff]
    %v76 = vld [vmem:[#allocation5 + $0x38] sm:$0xff]
    %v77 = vld [vmem:[#allocation5 + $0x40] sm:$0xff]
    %v78 = vld [vmem:[#allocation5 + $0x48] sm:$0xff]
    %v79 = vld [vmem:[#allocation5 + $0x50] sm:$0xff]
    %v80 = vld [vmem:[#allocation5 + $0x58] sm:$0xff]
    %v81 = vld [vmem:[#allocation5 + $0x60] sm:$0xff]
    %v82 = vld [vmem:[#allocation5 + $0x68] sm:$0xff]
    %v83 = vld [vmem:[#allocation5 + $0x70] sm:$0xff]
    %v84 = vld [vmem:[#allocation5 + $0x78] sm:$0xff]
    %v85 = vld [vmem:[#allocation5 + $0x80] sm:$0xff]
    %v86 = vld [vmem:[#allocation5 + $0x88] sm:$0xff]
    %v87 = vld [vmem:[#allocation5 + $0x90] sm:$0xff]
    %v88 = vld [vmem:[#allocation5 + $0x98] sm:$0xff]
    %v89 = vld [vmem:[#allocation5 + $0xa0] sm:$0xff]
    %v90 = vld [vmem:[#allocation5 + $0xa8] sm:$0xff]
    %v91 = vld [vmem:[#allocation5 + $0xb0] sm:$0xff]
    %v92 = vld [vmem:[#allocation5 + $0xb8] sm:$0xff]
    %v93 = vld [vmem:[#allocation5 + $0xc0] sm:$0xff]
    %v94 = vld [vmem:[#allocation5 + $0xc8] sm:$0xff]
    %v95 = vld [vmem:[#allocation5 + $0xd0] sm:$0xff]
    %v96 = vld [vmem:[#allocation5 + $0xd8] sm:$0xff]
    %v97 = vld [vmem:[#allocation5 + $0xe0] sm:$0xff]
    %v98 = vld [vmem:[#allocation5 + $0xe8] sm:$0xff]
    %v99 = vld [vmem:[#allocation5 + $0xf0] sm:$0xff]
    %v100 = vld [vmem:[#allocation5 + $0xf8] sm:$0xff]
    %v103 = vunpack.c.l.b16 %v67
    %v104 = vunpack.c.h.b16 %v67
    %v105 = vunpack.c.l.b16 %v68
    %v106 = vunpack.c.h.b16 %v68
    %v107 = vpack.c.b16 %v105, %v103
    %v108 = vpack.c.b16 %v106, %v104
    %v143 = vunpack.c.l.b16 %v69
    %v144 = vunpack.c.h.b16 %v69
    %v145 = vunpack.c.l.b16 %v70
    %v146 = vunpack.c.h.b16 %v70
    %v147 = vunpack.c.l.b16 %v71
    %v148 = vunpack.c.h.b16 %v71
    %v149 = vunpack.c.l.b16 %v72
    %v150 = vunpack.c.h.b16 %v72
    %v151 = vunpack.c.l.b16 %v73
    %v152 = vunpack.c.h.b16 %v73
    %v153 = vunpack.c.l.b16 %v74
    %v154 = vunpack.c.h.b16 %v74
    %v155 = vunpack.c.l.b16 %v75
    %v156 = vunpack.c.h.b16 %v75
    %v157 = vunpack.c.l.b16 %v76
    %v158 = vunpack.c.h.b16 %v76
    %v159 = vunpack.c.l.b16 %v77
    %v160 = vunpack.c.h.b16 %v77
    %v161 = vunpack.c.l.b16 %v78
    %v162 = vunpack.c.h.b16 %v78
    %v163 = vunpack.c.l.b16 %v79
    %v164 = vunpack.c.h.b16 %v79
    %v165 = vunpack.c.l.b16 %v80
    %v166 = vunpack.c.h.b16 %v80
    %v167 = vunpack.c.l.b16 %v81
    %v168 = vunpack.c.h.b16 %v81
    %v169 = vunpack.c.l.b16 %v82
    %v170 = vunpack.c.h.b16 %v82
    %v171 = vunpack.c.l.b16 %v83
    %v172 = vunpack.c.h.b16 %v83
    %v173 = vunpack.c.l.b16 %v84
    %v174 = vunpack.c.h.b16 %v84
    %v175 = vunpack.c.l.b16 %v85
    %v176 = vunpack.c.h.b16 %v85
    %v177 = vunpack.c.l.b16 %v86
    %v178 = vunpack.c.h.b16 %v86
    %v179 = vunpack.c.l.b16 %v87
    %v180 = vunpack.c.h.b16 %v87
    %v181 = vunpack.c.l.b16 %v88
    %v182 = vunpack.c.h.b16 %v88
    %v183 = vunpack.c.l.b16 %v89
    %v184 = vunpack.c.h.b16 %v89
    %v185 = vunpack.c.l.b16 %v90
    %v186 = vunpack.c.h.b16 %v90
    %v187 = vunpack.c.l.b16 %v91
    %v188 = vunpack.c.h.b16 %v91
    %v189 = vunpack.c.l.b16 %v92
    %v190 = vunpack.c.h.b16 %v92
    %v191 = vunpack.c.l.b16 %v93
    %v192 = vunpack.c.h.b16 %v93
    %v193 = vunpack.c.l.b16 %v94
    %v194 = vunpack.c.h.b16 %v94
    %v195 = vunpack.c.l.b16 %v95
    %v196 = vunpack.c.h.b16 %v95
    %v197 = vunpack.c.l.b16 %v96
    %v198 = vunpack.c.h.b16 %v96
    %v199 = vunpack.c.l.b16 %v97
    %v200 = vunpack.c.h.b16 %v97
    %v201 = vunpack.c.l.b16 %v98
    %v202 = vunpack.c.h.b16 %v98
    %v203 = vunpack.c.l.b16 %v99
    %v204 = vunpack.c.h.b16 %v99
    %v205 = vunpack.c.l.b16 %v100
    %v206 = vunpack.c.h.b16 %v100
    %v207 = vpack.c.b16 %v145, %v143
    %v208 = vpack.c.b16 %v146, %v144
    %v209 = vpack.c.b16 %v149, %v147
    %v210 = vpack.c.b16 %v150, %v148
    %v211 = vpack.c.b16 %v153, %v151
    %v212 = vpack.c.b16 %v154, %v152
    %v213 = vpack.c.b16 %v157, %v155
    %v214 = vpack.c.b16 %v158, %v156
    %v215 = vpack.c.b16 %v161, %v159
    %v216 = vpack.c.b16 %v162, %v160
    %v217 = vpack.c.b16 %v165, %v163
    %v218 = vpack.c.b16 %v166, %v164
    %v219 = vpack.c.b16 %v169, %v167
    %v220 = vpack.c.b16 %v170, %v168
    %v221 = vpack.c.b16 %v173, %v171
    %v222 = vpack.c.b16 %v174, %v172
    %v223 = vpack.c.b16 %v177, %v175
    %v224 = vpack.c.b16 %v178, %v176
    %v225 = vpack.c.b16 %v181, %v179
    %v226 = vpack.c.b16 %v182, %v180
    %v227 = vpack.c.b16 %v185, %v183
    %v228 = vpack.c.b16 %v186, %v184
    %v229 = vpack.c.b16 %v189, %v187
    %v230 = vpack.c.b16 %v190, %v188
    %v231 = vpack.c.b16 %v193, %v191
    %v232 = vpack.c.b16 %v194, %v192
    %v233 = vpack.c.b16 %v197, %v195
    %v234 = vpack.c.b16 %v198, %v196
    %v235 = vpack.c.b16 %v201, %v199
    %v236 = vpack.c.b16 %v202, %v200
    %v237 = vpack.c.b16 %v205, %v203
    %v238 = vpack.c.b16 %v206, %v204
    %271 = vmatprep.subr.bf16.mxu0 %v208
    %272 = vmatpush1.bf16.msra.mxu0 %v207
    %273 = vmatprep.subr.bf16.mxu0 %v210
    %274 = vmatpush1.bf16.msra.mxu0 %v209
    %275 = vmatprep.subr.bf16.mxu0 %v212
    %276 = vmatpush1.bf16.msra.mxu0 %v211
    %277 = vmatprep.subr.bf16.mxu0 %v214
    %278 = vmatpush1.bf16.msra.mxu0 %v213
    %279 = vmatprep.subr.bf16.mxu0 %v216
    %280 = vmatpush1.bf16.msra.mxu0 %v215
    %281 = vmatprep.subr.bf16.mxu0 %v218
    %282 = vmatpush1.bf16.msra.mxu0 %v217
    %283 = vmatprep.subr.bf16.mxu0 %v220
    %284 = vmatpush1.bf16.msra.mxu0 %v219
    %285 = vmatprep.subr.bf16.mxu0 %v222
    %286 = vmatpush1.bf16.msra.mxu0 %v221
    %287 = vmatprep.subr.bf16.mxu0 %v224
    %288 = vmatpush1.bf16.msra.mxu0 %v223
    %289 = vmatprep.subr.bf16.mxu0 %v226
    %290 = vmatpush1.bf16.msra.mxu0 %v225
    %291 = vmatprep.subr.bf16.mxu0 %v228
    %292 = vmatpush1.bf16.msra.mxu0 %v227
    %293 = vmatprep.subr.bf16.mxu0 %v230
    %294 = vmatpush1.bf16.msra.mxu0 %v229
    %295 = vmatprep.subr.bf16.mxu0 %v232
    %296 = vmatpush1.bf16.msra.mxu0 %v231
    %297 = vmatprep.subr.bf16.mxu0 %v234
    %298 = vmatpush1.bf16.msra.mxu0 %v233
    %299 = vmatprep.subr.bf16.mxu0 %v236
    %300 = vmatpush1.bf16.msra.mxu0 %v235
    %301 = vmatprep.subr.bf16.mxu0 %v238
    %302 = vmatpush1.bf16.msra.mxu0 %v237
    %303 = vmatprep.mubr.bf16.mxu0 %v108
    %304 = vmatmul.mubr.bf16.gmra.mrb[0].mxu0 %v107
    %v305 = vpop.f32.mrb[0].mxu0
    %v306 = vadd.f32 0.0, %v305
    %v307 = vpop.f32.mrb[0].mxu0
    %v308 = vadd.f32 0.0, %v307
    %v309 = vpop.f32.mrb[0].mxu0
    %v310 = vadd.f32 0.0, %v309
    %v311 = vpop.f32.mrb[0].mxu0
    %v312 = vadd.f32 0.0, %v311
    %313 = vdwg.mxu0
    %v314 = vadd.f32 %v63, %v306
    %v315 = vadd.f32 %v64, %v308
    %v316 = vadd.f32 %v65, %v310
    %v317 = vadd.f32 %v66, %v312
    %p318 = scmp.lt.s32.totalorder 0, 0
    // Predicated region
    $region26: #{tpu_custom_call.1} parent=1 // pred_check
      %p319 = pneg %p318
    $region27: #{tpu_custom_call.1} parent=1 // pred_check_branch
      %321 = sbr.rel (%p319) target = $region29
    $region28: #{tpu_custom_call.1} parent=1 // pred_region
      %322 = vst [vmem:[#allocation7] sm:$0xff] %v314
      %323 = vst [vmem:[#allocation7 + $0x8] sm:$0xff] %v315
      %324 = vst [vmem:[#allocation7 + $0x10] sm:$0xff] %v316
      %325 = vst [vmem:[#allocation7 + $0x18] sm:$0xff] %v317
    $region29: #{tpu_custom_call.1} parent=1 // pred_fallthru
      _
    // Predicated region
    $region30: #{tpu_custom_call.1} parent=1 // pred_check
      %p326 = pneg %p43
    $region31: #{tpu_custom_call.1} parent=1 // pred_check_branch
      %328 = sbr.rel (%p326) target = $region33
    $region32: #{tpu_custom_call.1} parent=1 // pred_region
      %v329 = vmax.f32 %v314, 0.0
      %v330 = vmax.f32 %v315, 0.0
      %v331 = vmax.f32 %v316, 0.0
      %v332 = vmax.f32 %v317, 0.0
      %333 = vst [vmem:[#allocation7] sm:$0xff] %v329
      %334 = vst [vmem:[#allocation7 + $0x8] sm:$0xff] %v330
      %335 = vst [vmem:[#allocation7 + $0x10] sm:$0xff] %v331
      %336 = vst [vmem:[#allocation7 + $0x18] sm:$0xff] %v332
    $region33: #{tpu_custom_call.1} parent=1 // pred_fallthru
      _
    // Predicated region
    $region34: #{tpu_custom_call.1} parent=1 // pred_check
      _
    $region35: #{tpu_custom_call.1} parent=1 // pred_check_branch
      %338 = sbr.rel (0) target = $region37
    $region36: #{tpu_custom_call.1} parent=1 // pred_region
      %s340 = ssub.s32 512, 512
      %341 = vsyncadd [#allocation4], %s340
      %s342 = sshll.u32 [#allocation7], 4
      %s343 = int_to_ptr.vmem [resolvable:$true] %s342
      %348 = dma.vmem_to_hbm [thread:$0]  %s343, 512, %s3, [#allocation4], 256, 256, 16
    $region37: #{tpu_custom_call.1} parent=1 // pred_fallthru
      _
    // Predicated region
    $region38: #{tpu_custom_call.1} parent=1 // pred_check
      _
    $region39: #{tpu_custom_call.1} parent=1 // pred_check_branch
      %350 = sbr.rel (0) target = $region41
    $region40: #{tpu_custom_call.1} parent=1 // pred_region
      %351 = dma.done [#allocation4], 512
    $region41: #{tpu_custom_call.1} parent=1 // pred_fallthru
      _
    %352 = vsyncpa [#allocation3], 1
    %353 = vsyncpa [#allocation6], 1
    %354 = vsyncpa [#allocation4], 1

</llo_original>
